<compile_context>
chip_gen: v7x
topology: tpu7x:2x2x1
jax: 0.10.0
libtpu: 0.0.40
codegen_flags: <defaults>
</compile_context>

<pallas_src>
import functools
import re

import jax
import jax.numpy as jnp
from jax.experimental import pallas as pl
from jax.experimental.pallas import tpu as pltpu


# --------------------------------------------------------------------------
# Hardware probing (best effort, always falls back to safe values).
# --------------------------------------------------------------------------
def _tpu_generation() -> int:
    try:
        kind = str(jax.devices()[0].device_kind)
    except Exception:
        return 0
    m = re.search(r"(\d+)", kind)
    return int(m.group(1)) if m else 0


def _vmem_budget_and_limit():
    """(tile-sizing budget bytes, vmem_limit_bytes) — generation aware."""
    cap = 64 * 1024 * 1024          # conservative fallback (v7x per-core VMEM)
    try:
        info = pltpu.get_tpu_info()
        cap = int(getattr(info, "vmem_capacity_bytes", cap) or cap)
    except Exception:
        pass
    # 128 MiB machines (v5e/v6e): limit 64 MiB, budget 48 MiB.
    # 64 MiB machines (v7x):      limit 40 MiB, budget 24 MiB.
    limit = min(64 * 1024 * 1024, cap // 2 + 8 * 1024 * 1024)
    budget = max(8 * 1024 * 1024, limit - 16 * 1024 * 1024)
    return budget, limit


def _choose_tile_lanes(L, S, C, pred_bytes, targ_bytes, comp_bytes, budget):
    """Largest 128-multiple lane tile fitting the VMEM budget, with the
    per-step input payload capped at ~4 MiB (step-overhead amortization)."""
    col_in = S * (C * pred_bytes + targ_bytes)       # bytes per lane column
    col_tmp = S * (C + 6) * comp_bytes               # live in-kernel temporaries
    tl = budget // (2 * col_in + col_tmp)            # double-buffered inputs + temps
    tl = min(tl, (4 * 1024 * 1024) // col_in)
    tl = max(128, (tl // 128) * 128)
    return L if tl >= L else int(tl)


# --------------------------------------------------------------------------
# Kernel
# --------------------------------------------------------------------------
def _full_sum_2d(x):
    # (S, TL) f32 -> (1, 1) f32; lane fold is mostly VPU adds, XLU tail is tiny.
    r = jnp.sum(x, axis=-1, keepdims=True)
    return jnp.sum(r, axis=-2, keepdims=True)


def _dice_kernel(pred_ref, targ_ref, num_ref, den_ref, *, n_classes,
                 lanes_valid, tile_lanes, blocks_per_split, total_blocks,
                 mask_needed, compute_dtype):
    # pred_ref: (1, C, S, TL) logits (native dtype)
    # targ_ref: (1, 1, S, TL) int labels (int8/int32)
    # num_ref / den_ref: (1, 1, 1, C) f32, VMEM-resident across the n axis.
    s_idx = pl.program_id(1)
    n_idx = pl.program_id(2)
    blk = s_idx * blocks_per_split + n_idx          # global lane-block index

    @pl.when(n_idx == 0)
    def _init():
        num_ref[...] = jnp.zeros_like(num_ref)
        den_ref[...] = jnp.zeros_like(den_ref)

    def accumulate(apply_mask):
        targ = targ_ref[0, 0].astype(jnp.int32)                       # (S, TL)
        xs = [pred_ref[0, c].astype(compute_dtype)
              for c in range(n_classes)]                              # C x (S, TL)

        # Softmax over the (unrolled) class axis: full-vreg VPU/EUP work,
        # no cross-sublane XLU reductions.
        m = xs[0]
        for c in range(1, n_classes):
            m = jnp.maximum(m, xs[c])
        es = [jnp.exp(x - m) for x in xs]
        den_sm = es[0]
        for c in range(1, n_classes):
            den_sm = den_sm + es[c]
        inv = 1.0 / den_sm                    # exact divide; EUP has slack

        if apply_mask:
            lane = jax.lax.broadcasted_iota(jnp.int32, targ.shape, 1)
            valid = (blk * tile_lanes + lane) < lanes_valid

        cls_iota = jax.lax.broadcasted_iota(jnp.int32, num_ref.shape, 3)
        num_tile = jnp.zeros(num_ref.shape, jnp.float32)
        den_tile = jnp.zeros(den_ref.shape, jnp.float32)
        for c in range(n_classes):
            p = es[c] * inv                                           # (S, TL)
            t = targ == c
            if apply_mask:
                # jnp.where (not multiply): OOB lanes may hold inf/NaN garbage.
                p = jnp.where(valid, p, 0.0)
                t = jnp.logical_and(t, valid)
            tf = t.astype(compute_dtype)
            num_c = _full_sum_2d((p * tf).astype(jnp.float32))        # (1, 1)
            den_c = _full_sum_2d((p * p + tf).astype(jnp.float32))    # (1, 1)
            num_tile = jnp.where(cls_iota == c, num_c, num_tile)
            den_tile = jnp.where(cls_iota == c, den_c, den_tile)
        num_ref[...] += num_tile
        den_ref[...] += den_tile

    if mask_needed:
        # Only tiles at/after the last real lane-block can hold invalid
        # columns; every earlier tile runs the mask-free body.
        tail = blk >= (total_blocks - 1)

        @pl.when(tail)
        def _masked():
            accumulate(True)

        @pl.when(jnp.logical_not(tail))
        def _clean():
            accumulate(False)
    else:
        accumulate(False)


# --------------------------------------------------------------------------
# Wrapper
# --------------------------------------------------------------------------
def dice_coeff(predict, target, *, smooth=1.0, tile_lanes=None,
               compute_dtype=None, n_splits=None):
    """predict: (B, C, H, W) float logits; target: (B, H, W) int labels.
    Returns per-class dice loss, shape (C,) float32."""
    B, C, H, W = predict.shape
    N = H * W

    gen = _tpu_generation()
    budget, vmem_limit = _vmem_budget_and_limit()

    # Elementwise math dtype: bf16 on v6e/v7x (bf16 VALU/EUP), f32 otherwise.
    if compute_dtype is None:
        compute_dtype = jnp.bfloat16 if gen >= 6 else jnp.float32
    compute_dtype = jnp.dtype(compute_dtype)

    # Keep logits in their native floating dtype in HBM (bf16 stays bf16).
    pred_dtype = predict.dtype if jnp.issubdtype(predict.dtype, jnp.floating) \
        else jnp.float32
    targ_dtype = jnp.int8 if C <= 127 else jnp.int32

    # Spatial-on-sublane layout: N = S * L, S = largest of {8,4,2,1} dividing N.
    # (Pure trailing-dim reshape: no HBM copy, unlike the old jnp.pad path.)
    S = next(s for s in (8, 4, 2, 1) if N % s == 0)
    L = N // S
    pred = predict.reshape(B, C, S, L).astype(pred_dtype)
    targ = target.reshape(B, 1, S, L).astype(targ_dtype)

    pred_bytes = jnp.dtype(pred_dtype).itemsize
    targ_bytes = jnp.dtype(targ_dtype).itemsize
    comp_bytes = jnp.dtype(compute_dtype).itemsize

    if L <= 128:
        tl = L
    elif tile_lanes is not None:
        tl = L if int(tile_lanes) >= L else max(128, (int(tile_lanes) // 128) * 128)
    else:
        tl = _choose_tile_lanes(L, S, C, pred_bytes, targ_bytes, comp_bytes, budget)

    total_blocks = (L + tl - 1) // tl
    if n_splits is None:
        ns = 2 if (gen >= 7 and B == 1 and total_blocks >= 2) else 1
    else:
        ns = max(1, int(n_splits))
    grid_n = (total_blocks + ns - 1) // ns          # n-steps per split
    mask_needed = (ns * grid_n * tl) != L
    last_blk = total_blocks - 1

    kernel = functools.partial(
        _dice_kernel,
        n_classes=C,
        lanes_valid=L,
        tile_lanes=tl,
        blocks_per_split=grid_n,
        total_blocks=total_blocks,
        mask_needed=mask_needed,
        compute_dtype=compute_dtype,
    )

    if ns == 1:
        def data_map(b, s, n):
            return (b, 0, 0, n)
    else:
        # Clamp so a (possibly) dead trailing block never issues a fully-OOB
        # DMA; its contribution is zeroed by the in-kernel mask anyway.
        def data_map(b, s, n):
            return (b, 0, 0, jnp.minimum(s * grid_n + n, last_blk))

    def out_map(b, s, n):
        return (b, s, 0, 0)

    num_out, den_out = pl.pallas_call(
        kernel,
        out_shape=(jax.ShapeDtypeStruct((B, ns, 1, C), jnp.float32),
                   jax.ShapeDtypeStruct((B, ns, 1, C), jnp.float32)),
        grid=(B, ns, grid_n),
        in_specs=[
            pl.BlockSpec((1, C, S, tl), data_map),
            pl.BlockSpec((1, 1, S, tl), data_map),
        ],
        out_specs=(
            pl.BlockSpec((1, 1, 1, C), out_map),
            pl.BlockSpec((1, 1, 1, C), out_map),
        ),
        compiler_params=pltpu.CompilerParams(
            dimension_semantics=("parallel", "parallel", "arbitrary"),
            vmem_limit_bytes=int(vmem_limit),
        ),
    )(pred, targ)

    # Tiny finalize in the wrapper: combine splits, smooth, loss, mean over B.
    num = jnp.sum(num_out, axis=(1, 2))             # (B, C)
    den = jnp.sum(den_out, axis=(1, 2))             # (B, C)
    loss_b = 1.0 - (num + smooth) / (den + smooth)
    return jnp.mean(loss_b, axis=0)                 # (C,)


# --------------------------------------------------------------------------
# Pure-JAX reference mirroring the PyTorch module.
# --------------------------------------------------------------------------
def _reference(predict, target, smooth=1.0):
    B, C, H, W = predict.shape
    p = jax.nn.softmax(predict.astype(jnp.float32), axis=1).reshape(B, C, -1)
    t = (target.reshape(B, 1, -1) == jnp.arange(C)[None, :, None]).astype(jnp.float32)
    num = jnp.sum(p * t, axis=2) + smooth
    den = jnp.sum(p * p + t * t, axis=2) + smooth
    return jnp.mean(1.0 - num / den, axis=0)


if __name__ == "__main__":
    key = jax.random.PRNGKey(0)
    k1, k2, k3, k4, k5, k6 = jax.random.split(key, 6)

    TIGHT = dict(atol=2e-5, rtol=2e-5)   # forced f32-compute path
    LOOSE = dict(atol=2e-2, rtol=2e-2)   # auto path may use bf16 elementwise math

    # Case 1: B=2, C=4, 16x16 — single tile, f32 compute (tight parity).
    B, C, H, W = 2, 4, 16, 16
    predict = jax.random.normal(k1, (B, C, H, W), dtype=jnp.float32)
    target = jax.random.randint(k2, (B, H, W), 0, C, dtype=jnp.int32)
    ref = _reference(predict, target)
    out = jax.block_until_ready(dice_coeff(predict, target,
                                           compute_dtype=jnp.float32))
    assert out.shape == (C,)
    assert jnp.allclose(out, ref, **TIGHT), (out, ref)

    # Case 2: same inputs, auto compute dtype (bf16 on v6e/v7x, f32 elsewhere).
    out2 = jax.block_until_ready(dice_coeff(predict, target))
    assert jnp.allclose(out2, ref, **LOOSE), (out2, ref)

    # Case 3: ragged spatial size 10x10 (N=100 -> S=4, L=25), f32 compute.
    predict3 = jax.random.normal(k3, (2, 4, 10, 10), dtype=jnp.float32)
    target3 = jax.random.randint(k4, (2, 10, 10), 0, 4, dtype=jnp.int32)
    out3 = jax.block_until_ready(dice_coeff(predict3, target3,
                                            compute_dtype=jnp.float32))
    assert jnp.allclose(out3, _reference(predict3, target3), **TIGHT), out3

    # Case 4: B=1, C=3, 40x40 — forced 2-way reduction split + 128-lane tiles
    # (exercises masked ragged tail + split block clamping), f32 compute.
    predict4 = jax.random.normal(k5, (1, 3, 40, 40), dtype=jnp.float32)
    target4 = jax.random.randint(k6, (1, 40, 40), 0, 3, dtype=jnp.int32)
    ref4 = _reference(predict4, target4)
    out4 = jax.block_until_ready(dice_coeff(predict4, target4, tile_lanes=128,
                                            n_splits=2,
                                            compute_dtype=jnp.float32))
    assert jnp.allclose(out4, ref4, **TIGHT), (out4, ref4)

    # Case 5: same inputs, multi-step streaming reduction (n_splits=1), auto dtype.
    out5 = jax.block_until_ready(dice_coeff(predict4, target4, tile_lanes=128,
                                            n_splits=1))
    assert jnp.allclose(out5, ref4, **LOOSE), (out5, ref4)

    print("KERNEL_OK")
</pallas_src>

<mosaic_0001>
module attributes {stable_mosaic.version = 11 : i64} {
  func.func @_dice_kernel(%arg0: i32, %arg1: i32, %arg2: i32, %arg3: memref<1x4x8x32xf32, #tpu.memory_space<vmem>>, %arg4: memref<1x1x8x32xi8, #tpu.memory_space<vmem>>, %arg5: memref<1x1x1x4xf32, #tpu.memory_space<vmem>>, %arg6: memref<1x1x1x4xf32, #tpu.memory_space<vmem>>) attributes {dimension_semantics = [#tpu.dimension_semantics<parallel>, #tpu.dimension_semantics<parallel>, #tpu.dimension_semantics<arbitrary>], iteration_bounds = array<i64: 2, 1, 1>, scalar_prefetch = 0 : i64, scratch_operands = 0 : i64, tpu.core_type = #tpu.core_type<tc>, window_params = [{transform_indices = @transform_0, window_bounds = array<i64: 1, 4, 8, 32>}, {transform_indices = @transform_1, window_bounds = array<i64: 1, 1, 8, 32>}, {transform_indices = @transform_2, window_bounds = array<i64: 1, 1, 1, 4>}, {transform_indices = @transform_3, window_bounds = array<i64: 1, 1, 1, 4>}]} {
    %c0_i32 = arith.constant 0 : i32
    %0 = arith.cmpi eq, %arg2, %c0_i32 : i32
    %1 = arith.extui %0 : i1 to i32
    %c0_i32_0 = arith.constant 0 : i32
    %2 = arith.cmpi ne, %1, %c0_i32_0 : i32
    scf.if %2 {
      %cst_60 = arith.constant 0.000000e+00 : f32
      %143 = vector.broadcast %cst_60 : f32 to vector<1x1x1x4xf32>
      %c0_61 = arith.constant 0 : index
      %c0_62 = arith.constant 0 : index
      %c0_63 = arith.constant 0 : index
      %c0_64 = arith.constant 0 : index
      %144 = vector.load %arg5[%c0_61, %c0_62, %c0_63, %c0_64] : memref<1x1x1x4xf32, #tpu.memory_space<vmem>>, vector<1x1x1x4xf32>
      tpu.vector_store %arg5[%c0_61, %c0_62, %c0_63, %c0_64], %143 {strides = array<i32>} : memref<1x1x1x4xf32, #tpu.memory_space<vmem>>, vector<1x1x1x4xf32>,
      %cst_65 = arith.constant 0.000000e+00 : f32
      %145 = vector.broadcast %cst_65 : f32 to vector<1x1x1x4xf32>
      %c0_66 = arith.constant 0 : index
      %c0_67 = arith.constant 0 : index
      %c0_68 = arith.constant 0 : index
      %c0_69 = arith.constant 0 : index
      %146 = vector.load %arg6[%c0_66, %c0_67, %c0_68, %c0_69] : memref<1x1x1x4xf32, #tpu.memory_space<vmem>>, vector<1x1x1x4xf32>
      tpu.vector_store %arg6[%c0_66, %c0_67, %c0_68, %c0_69], %145 {strides = array<i32>} : memref<1x1x1x4xf32, #tpu.memory_space<vmem>>, vector<1x1x1x4xf32>,
    } else {
    }
    %c0 = arith.constant 0 : index
    %c0_1 = arith.constant 0 : index
    %c0_2 = arith.constant 0 : index
    %c0_3 = arith.constant 0 : index
    %3 = vector.load %arg4[%c0, %c0_1, %c0_2, %c0_3] : memref<1x1x8x32xi8, #tpu.memory_space<vmem>>, vector<1x1x8x32xi8>
    %4 = vector.shape_cast %3 : vector<1x1x8x32xi8> to vector<8x32xi8>
    %5 = arith.extsi %4 : vector<8x32xi8> to vector<8x32xi32>
    %c0_4 = arith.constant 0 : index
    %c0_5 = arith.constant 0 : index
    %c0_6 = arith.constant 0 : index
    %c0_7 = arith.constant 0 : index
    %6 = vector.load %arg3[%c0_4, %c0_5, %c0_6, %c0_7] : memref<1x4x8x32xf32, #tpu.memory_space<vmem>>, vector<1x1x8x32xf32>
    %7 = vector.shape_cast %6 : vector<1x1x8x32xf32> to vector<8x32xf32>
    %c0_8 = arith.constant 0 : index
    %c1 = arith.constant 1 : index
    %c0_9 = arith.constant 0 : index
    %c0_10 = arith.constant 0 : index
    %8 = vector.load %arg3[%c0_8, %c1, %c0_9, %c0_10] : memref<1x4x8x32xf32, #tpu.memory_space<vmem>>, vector<1x1x8x32xf32>
    %9 = vector.shape_cast %8 : vector<1x1x8x32xf32> to vector<8x32xf32>
    %c0_11 = arith.constant 0 : index
    %c2 = arith.constant 2 : index
    %c0_12 = arith.constant 0 : index
    %c0_13 = arith.constant 0 : index
    %10 = vector.load %arg3[%c0_11, %c2, %c0_12, %c0_13] : memref<1x4x8x32xf32, #tpu.memory_space<vmem>>, vector<1x1x8x32xf32>
    %11 = vector.shape_cast %10 : vector<1x1x8x32xf32> to vector<8x32xf32>
    %c0_14 = arith.constant 0 : index
    %c3 = arith.constant 3 : index
    %c0_15 = arith.constant 0 : index
    %c0_16 = arith.constant 0 : index
    %12 = vector.load %arg3[%c0_14, %c3, %c0_15, %c0_16] : memref<1x4x8x32xf32, #tpu.memory_space<vmem>>, vector<1x1x8x32xf32>
    %13 = vector.shape_cast %12 : vector<1x1x8x32xf32> to vector<8x32xf32>
    %14 = arith.maximumf %7, %9 : vector<8x32xf32>
    %15 = arith.maximumf %14, %11 : vector<8x32xf32>
    %16 = arith.maximumf %15, %13 : vector<8x32xf32>
    %17 = arith.subf %7, %16 : vector<8x32xf32>
    %18 = math.exp %17 : vector<8x32xf32>
    %19 = arith.subf %9, %16 : vector<8x32xf32>
    %20 = math.exp %19 : vector<8x32xf32>
    %21 = arith.subf %11, %16 : vector<8x32xf32>
    %22 = math.exp %21 : vector<8x32xf32>
    %23 = arith.subf %13, %16 : vector<8x32xf32>
    %24 = math.exp %23 : vector<8x32xf32>
    %25 = arith.addf %18, %20 : vector<8x32xf32>
    %26 = arith.addf %25, %22 : vector<8x32xf32>
    %27 = arith.addf %26, %24 : vector<8x32xf32>
    %cst = arith.constant 1.000000e+00 : f32
    %28 = vector.broadcast %cst : f32 to vector<8x32xf32>
    %29 = arith.divf %28, %27 : vector<8x32xf32>
    %30 = tpu.iota {dimensions = array<i32: 3>} : vector<1x1x1x4xi32>
    %cst_17 = arith.constant 0.000000e+00 : f32
    %31 = vector.broadcast %cst_17 : f32 to vector<1x1x1x4xf32>
    %cst_18 = arith.constant 0.000000e+00 : f32
    %32 = vector.broadcast %cst_18 : f32 to vector<1x1x1x4xf32>
    %33 = arith.mulf %18, %29 : vector<8x32xf32>
    %c0_i32_19 = arith.constant 0 : i32
    %34 = vector.broadcast %c0_i32_19 : i32 to vector<8x32xi32>
    %35 = arith.cmpi eq, %5, %34 : vector<8x32xi32>
    %36 = arith.extui %35 : vector<8x32xi1> to vector<8x32xi32>
    %37 = arith.sitofp %36 : vector<8x32xi32> to vector<8x32xf32>
    %38 = arith.mulf %33, %37 : vector<8x32xf32>
    %cst_20 = arith.constant dense<0.000000e+00> : vector<8xf32>
    %39 = vector.multi_reduction <add>, %38, %cst_20 [1] : vector<8x32xf32> to vector<8xf32>
    %40 = vector.shape_cast %39 : vector<8xf32> to vector<8x1xf32>
    %cst_21 = arith.constant dense<0.000000e+00> : vector<1xf32>
    %41 = vector.multi_reduction <add>, %40, %cst_21 [0] : vector<8x1xf32> to vector<1xf32>
    %42 = vector.shape_cast %41 : vector<1xf32> to vector<1x1xf32>
    %43 = arith.mulf %33, %33 : vector<8x32xf32>
    %44 = arith.addf %43, %37 : vector<8x32xf32>
    %cst_22 = arith.constant dense<0.000000e+00> : vector<8xf32>
    %45 = vector.multi_reduction <add>, %44, %cst_22 [1] : vector<8x32xf32> to vector<8xf32>
    %46 = vector.shape_cast %45 : vector<8xf32> to vector<8x1xf32>
    %cst_23 = arith.constant dense<0.000000e+00> : vector<1xf32>
    %47 = vector.multi_reduction <add>, %46, %cst_23 [0] : vector<8x1xf32> to vector<1xf32>
    %48 = vector.shape_cast %47 : vector<1xf32> to vector<1x1xf32>
    %c0_i32_24 = arith.constant 0 : i32
    %49 = vector.broadcast %c0_i32_24 : i32 to vector<1x1x1x4xi32>
    %50 = arith.cmpi eq, %30, %49 : vector<1x1x1x4xi32>
    %51 = vector.shape_cast %42 : vector<1x1xf32> to vector<1x1x1x1xf32>
    %52 = vector.broadcast %51 : vector<1x1x1x1xf32> to vector<1x1x1x4xf32>
    %53 = arith.select %50, %52, %31 : vector<1x1x1x4xi1>, vector<1x1x1x4xf32>
    %c0_i32_25 = arith.constant 0 : i32
    %54 = vector.broadcast %c0_i32_25 : i32 to vector<1x1x1x4xi32>
    %55 = arith.cmpi eq, %30, %54 : vector<1x1x1x4xi32>
    %56 = vector.shape_cast %48 : vector<1x1xf32> to vector<1x1x1x1xf32>
    %57 = vector.broadcast %56 : vector<1x1x1x1xf32> to vector<1x1x1x4xf32>
    %58 = arith.select %55, %57, %32 : vector<1x1x1x4xi1>, vector<1x1x1x4xf32>
    %59 = arith.mulf %20, %29 : vector<8x32xf32>
    %c1_i32 = arith.constant 1 : i32
    %60 = vector.broadcast %c1_i32 : i32 to vector<8x32xi32>
    %61 = arith.cmpi eq, %5, %60 : vector<8x32xi32>
    %62 = arith.extui %61 : vector<8x32xi1> to vector<8x32xi32>
    %63 = arith.sitofp %62 : vector<8x32xi32> to vector<8x32xf32>
    %64 = arith.mulf %59, %63 : vector<8x32xf32>
    %cst_26 = arith.constant dense<0.000000e+00> : vector<8xf32>
    %65 = vector.multi_reduction <add>, %64, %cst_26 [1] : vector<8x32xf32> to vector<8xf32>
    %66 = vector.shape_cast %65 : vector<8xf32> to vector<8x1xf32>
    %cst_27 = arith.constant dense<0.000000e+00> : vector<1xf32>
    %67 = vector.multi_reduction <add>, %66, %cst_27 [0] : vector<8x1xf32> to vector<1xf32>
    %68 = vector.shape_cast %67 : vector<1xf32> to vector<1x1xf32>
    %69 = arith.mulf %59, %59 : vector<8x32xf32>
    %70 = arith.addf %69, %63 : vector<8x32xf32>
    %cst_28 = arith.constant dense<0.000000e+00> : vector<8xf32>
    %71 = vector.multi_reduction <add>, %70, %cst_28 [1] : vector<8x32xf32> to vector<8xf32>
    %72 = vector.shape_cast %71 : vector<8xf32> to vector<8x1xf32>
    %cst_29 = arith.constant dense<0.000000e+00> : vector<1xf32>
    %73 = vector.multi_reduction <add>, %72, %cst_29 [0] : vector<8x1xf32> to vector<1xf32>
    %74 = vector.shape_cast %73 : vector<1xf32> to vector<1x1xf32>
    %c1_i32_30 = arith.constant 1 : i32
    %75 = vector.broadcast %c1_i32_30 : i32 to vector<1x1x1x4xi32>
    %76 = arith.cmpi eq, %30, %75 : vector<1x1x1x4xi32>
    %77 = vector.shape_cast %68 : vector<1x1xf32> to vector<1x1x1x1xf32>
    %78 = vector.broadcast %77 : vector<1x1x1x1xf32> to vector<1x1x1x4xf32>
    %79 = arith.select %76, %78, %53 : vector<1x1x1x4xi1>, vector<1x1x1x4xf32>
    %c1_i32_31 = arith.constant 1 : i32
    %80 = vector.broadcast %c1_i32_31 : i32 to vector<1x1x1x4xi32>
    %81 = arith.cmpi eq, %30, %80 : vector<1x1x1x4xi32>
    %82 = vector.shape_cast %74 : vector<1x1xf32> to vector<1x1x1x1xf32>
    %83 = vector.broadcast %82 : vector<1x1x1x1xf32> to vector<1x1x1x4xf32>
    %84 = arith.select %81, %83, %58 : vector<1x1x1x4xi1>, vector<1x1x1x4xf32>
    %85 = arith.mulf %22, %29 : vector<8x32xf32>
    %c2_i32 = arith.constant 2 : i32
    %86 = vector.broadcast %c2_i32 : i32 to vector<8x32xi32>
    %87 = arith.cmpi eq, %5, %86 : vector<8x32xi32>
    %88 = arith.extui %87 : vector<8x32xi1> to vector<8x32xi32>
    %89 = arith.sitofp %88 : vector<8x32xi32> to vector<8x32xf32>
    %90 = arith.mulf %85, %89 : vector<8x32xf32>
    %cst_32 = arith.constant dense<0.000000e+00> : vector<8xf32>
    %91 = vector.multi_reduction <add>, %90, %cst_32 [1] : vector<8x32xf32> to vector<8xf32>
    %92 = vector.shape_cast %91 : vector<8xf32> to vector<8x1xf32>
    %cst_33 = arith.constant dense<0.000000e+00> : vector<1xf32>
    %93 = vector.multi_reduction <add>, %92, %cst_33 [0] : vector<8x1xf32> to vector<1xf32>
    %94 = vector.shape_cast %93 : vector<1xf32> to vector<1x1xf32>
    %95 = arith.mulf %85, %85 : vector<8x32xf32>
    %96 = arith.addf %95, %89 : vector<8x32xf32>
    %cst_34 = arith.constant dense<0.000000e+00> : vector<8xf32>
    %97 = vector.multi_reduction <add>, %96, %cst_34 [1] : vector<8x32xf32> to vector<8xf32>
    %98 = vector.shape_cast %97 : vector<8xf32> to vector<8x1xf32>
    %cst_35 = arith.constant dense<0.000000e+00> : vector<1xf32>
    %99 = vector.multi_reduction <add>, %98, %cst_35 [0] : vector<8x1xf32> to vector<1xf32>
    %100 = vector.shape_cast %99 : vector<1xf32> to vector<1x1xf32>
    %c2_i32_36 = arith.constant 2 : i32
    %101 = vector.broadcast %c2_i32_36 : i32 to vector<1x1x1x4xi32>
    %102 = arith.cmpi eq, %30, %101 : vector<1x1x1x4xi32>
    %103 = vector.shape_cast %94 : vector<1x1xf32> to vector<1x1x1x1xf32>
    %104 = vector.broadcast %103 : vector<1x1x1x1xf32> to vector<1x1x1x4xf32>
    %105 = arith.select %102, %104, %79 : vector<1x1x1x4xi1>, vector<1x1x1x4xf32>
    %c2_i32_37 = arith.constant 2 : i32
    %106 = vector.broadcast %c2_i32_37 : i32 to vector<1x1x1x4xi32>
    %107 = arith.cmpi eq, %30, %106 : vector<1x1x1x4xi32>
    %108 = vector.shape_cast %100 : vector<1x1xf32> to vector<1x1x1x1xf32>
    %109 = vector.broadcast %108 : vector<1x1x1x1xf32> to vector<1x1x1x4xf32>
    %110 = arith.select %107, %109, %84 : vector<1x1x1x4xi1>, vector<1x1x1x4xf32>
    %111 = arith.mulf %24, %29 : vector<8x32xf32>
    %c3_i32 = arith.constant 3 : i32
    %112 = vector.broadcast %c3_i32 : i32 to vector<8x32xi32>
    %113 = arith.cmpi eq, %5, %112 : vector<8x32xi32>
    %114 = arith.extui %113 : vector<8x32xi1> to vector<8x32xi32>
    %115 = arith.sitofp %114 : vector<8x32xi32> to vector<8x32xf32>
    %116 = arith.mulf %111, %115 : vector<8x32xf32>
    %cst_38 = arith.constant dense<0.000000e+00> : vector<8xf32>
    %117 = vector.multi_reduction <add>, %116, %cst_38 [1] : vector<8x32xf32> to vector<8xf32>
    %118 = vector.shape_cast %117 : vector<8xf32> to vector<8x1xf32>
    %cst_39 = arith.constant dense<0.000000e+00> : vector<1xf32>
    %119 = vector.multi_reduction <add>, %118, %cst_39 [0] : vector<8x1xf32> to vector<1xf32>
    %120 = vector.shape_cast %119 : vector<1xf32> to vector<1x1xf32>
    %121 = arith.mulf %111, %111 : vector<8x32xf32>
    %122 = arith.addf %121, %115 : vector<8x32xf32>
    %cst_40 = arith.constant dense<0.000000e+00> : vector<8xf32>
    %123 = vector.multi_reduction <add>, %122, %cst_40 [1] : vector<8x32xf32> to vector<8xf32>
    %124 = vector.shape_cast %123 : vector<8xf32> to vector<8x1xf32>
    %cst_41 = arith.constant dense<0.000000e+00> : vector<1xf32>
    %125 = vector.multi_reduction <add>, %124, %cst_41 [0] : vector<8x1xf32> to vector<1xf32>
    %126 = vector.shape_cast %125 : vector<1xf32> to vector<1x1xf32>
    %c3_i32_42 = arith.constant 3 : i32
    %127 = vector.broadcast %c3_i32_42 : i32 to vector<1x1x1x4xi32>
    %128 = arith.cmpi eq, %30, %127 : vector<1x1x1x4xi32>
    %129 = vector.shape_cast %120 : vector<1x1xf32> to vector<1x1x1x1xf32>
    %130 = vector.broadcast %129 : vector<1x1x1x1xf32> to vector<1x1x1x4xf32>
    %131 = arith.select %128, %130, %105 : vector<1x1x1x4xi1>, vector<1x1x1x4xf32>
    %c3_i32_43 = arith.constant 3 : i32
    %132 = vector.broadcast %c3_i32_43 : i32 to vector<1x1x1x4xi32>
    %133 = arith.cmpi eq, %30, %132 : vector<1x1x1x4xi32>
    %134 = vector.shape_cast %126 : vector<1x1xf32> to vector<1x1x1x1xf32>
    %135 = vector.broadcast %134 : vector<1x1x1x1xf32> to vector<1x1x1x4xf32>
    %136 = arith.select %133, %135, %110 : vector<1x1x1x4xi1>, vector<1x1x1x4xf32>
    %c0_44 = arith.constant 0 : index
    %c0_45 = arith.constant 0 : index
    %c0_46 = arith.constant 0 : index
    %c0_47 = arith.constant 0 : index
    %137 = vector.load %arg5[%c0_44, %c0_45, %c0_46, %c0_47] : memref<1x1x1x4xf32, #tpu.memory_space<vmem>>, vector<1x1x1x4xf32>
    %138 = arith.addf %137, %131 : vector<1x1x1x4xf32>
    %c0_48 = arith.constant 0 : index
    %c0_49 = arith.constant 0 : index
    %c0_50 = arith.constant 0 : index
    %c0_51 = arith.constant 0 : index
    %139 = vector.load %arg5[%c0_48, %c0_49, %c0_50, %c0_51] : memref<1x1x1x4xf32, #tpu.memory_space<vmem>>, vector<1x1x1x4xf32>
    tpu.vector_store %arg5[%c0_48, %c0_49, %c0_50, %c0_51], %138 {strides = array<i32>} : memref<1x1x1x4xf32, #tpu.memory_space<vmem>>, vector<1x1x1x4xf32>,
    %c0_52 = arith.constant 0 : index
    %c0_53 = arith.constant 0 : index
    %c0_54 = arith.constant 0 : index
    %c0_55 = arith.constant 0 : index
    %140 = vector.load %arg6[%c0_52, %c0_53, %c0_54, %c0_55] : memref<1x1x1x4xf32, #tpu.memory_space<vmem>>, vector<1x1x1x4xf32>
    %141 = arith.addf %140, %136 : vector<1x1x1x4xf32>
    %c0_56 = arith.constant 0 : index
    %c0_57 = arith.constant 0 : index
    %c0_58 = arith.constant 0 : index
    %c0_59 = arith.constant 0 : index
    %142 = vector.load %arg6[%c0_56, %c0_57, %c0_58, %c0_59] : memref<1x1x1x4xf32, #tpu.memory_space<vmem>>, vector<1x1x1x4xf32>
    tpu.vector_store %arg6[%c0_56, %c0_57, %c0_58, %c0_59], %141 {strides = array<i32>} : memref<1x1x1x4xf32, #tpu.memory_space<vmem>>, vector<1x1x1x4xf32>,
    return
  }
  func.func @transform_0(%arg0: i32, %arg1: i32, %arg2: i32) -> (i32, i32, i32, i32) {
    %c0_i32 = arith.constant 0 : i32
    %c0_i32_0 = arith.constant 0 : i32
    %c0_i32_1 = arith.constant 0 : i32
    return %arg0, %c0_i32, %c0_i32_0, %arg2 : i32, i32, i32, i32
  }
  func.func @transform_1(%arg0: i32, %arg1: i32, %arg2: i32) -> (i32, i32, i32, i32) {
    %c0_i32 = arith.constant 0 : i32
    %c0_i32_0 = arith.constant 0 : i32
    %c0_i32_1 = arith.constant 0 : i32
    return %arg0, %c0_i32, %c0_i32_0, %arg2 : i32, i32, i32, i32
  }
  func.func @transform_2(%arg0: i32, %arg1: i32, %arg2: i32) -> (i32, i32, i32, i32) {
    %c0_i32 = arith.constant 0 : i32
    %c0_i32_0 = arith.constant 0 : i32
    %c0_i32_1 = arith.constant 0 : i32
    return %arg0, %arg1, %c0_i32, %c0_i32_0 : i32, i32, i32, i32
  }
  func.func @transform_3(%arg0: i32, %arg1: i32, %arg2: i32) -> (i32, i32, i32, i32) {
    %c0_i32 = arith.constant 0 : i32
    %c0_i32_0 = arith.constant 0 : i32
    %c0_i32_1 = arith.constant 0 : i32
    return %arg0, %arg1, %c0_i32, %c0_i32_0 : i32, i32, i32, i32
  }
}

</mosaic_0001>

<llo_original>
// kernel: tpu_custom_call.1
$region0: #{tpu_custom_call.1}
  #allocation0 [shape = 'u32[]', space=smem, size = 0x4, offset = 0x4, fixed_abs, tag = 'smem constant byte address 0x4 - core index']
  #allocation1 [shape = 'u32[144,128]{1,0:T(1,128)}', space=vmem, size = 0x12000, scoped, tag = 'internal scratch']
  %s0 = inlined_call_operand.hbm [shape: f32[2,4,8,32], index: 0, kind: input, shape index: {}]
  %s1 = inlined_call_operand.hbm [shape: s8[2,1,8,32], index: 1, kind: input, shape index: {}]
  %s2 = inlined_call_operand.hbm [shape: f32[2,1,1,4], index: 2, kind: output, shape index: {0}]
  %s3 = inlined_call_operand.hbm [shape: f32[2,1,1,4], index: 3, kind: output, shape index: {1}]
  %4 = xla_tuple %s2, %s3
  %s5 = sld [smem:[#allocation0]]
  $region61: #{tpu_custom_call.1} parent=0
    _
  %s7 = ssub.s32 1, %s5
  %s8 = scalar_select 0, %s7, %s5
  $region1: #{tpu_custom_call.1} parent=0
    #allocation2 [shape = 'u8[32768]{0}', space=vmem, size = 0x8000, scoped, tag = 'input window, operand 0']
    #allocation3 [shape = 's32[2]{0}', space=sflag, size = 0x8, scoped, tag = 'scoped memory for tpu_custom_call.1']
    #allocation4 [shape = 's32[2]{0}', space=sflag, size = 0x8, scoped, tag = 'scoped memory for tpu_custom_call.1']
    #allocation5 [shape = 'u8[2048]{0}', space=vmem, size = 0x800, scoped, tag = 'input window, operand 1']
    #allocation6 [shape = 's32[2]{0}', space=sflag, size = 0x8, scoped, tag = 'scoped memory for tpu_custom_call.1']
    #allocation7 [shape = 'u8[1024]{0}', space=vmem, size = 0x400, scoped, tag = 'output window, operand 0']
    #allocation8 [shape = 'u8[1024]{0}', space=vmem, size = 0x400, scoped, tag = 'output window, operand 1']
    #allocation9 [shape = 's32[2]{0}', space=sflag, size = 0x8, scoped, tag = 'scoped memory for tpu_custom_call.1']
    %9 = vsyncpa [#allocation3], 0
    %s10 = scalar_lea.sflag [#allocation3], 1
    %11 = vsyncpa %s10, 0
    %12 = vsyncpa [#allocation6], 0
    %s13 = scalar_lea.sflag [#allocation6], 1
    %14 = vsyncpa %s13, 0
    %15 = vsyncpa [#allocation4], 0
    %s16 = scalar_lea.sflag [#allocation4], 1
    %17 = vsyncpa %s16, 0
    %18 = vsyncpa [#allocation9], 0
    %s19 = scalar_lea.sflag [#allocation9], 1
    %20 = vsyncpa %s19, 0
    loop: start=0, step=1, limit=4
    $region2: #{tpu_custom_call.1} parent=1 // loop_pre_header
      _
    $region3: #{tpu_custom_call.1} parent=1 // loop_header
      %s22 = sphi 0, %s26
      %p23 = scmp.ge.s32.totalorder %s22, 4
      %s29 = sphi 0, %s48
      %s30 = sphi 0, %s44
      %s31 = sphi 0, %s40
      %s32 = sphi 0, %s29
      %s33 = sphi 0, %s30
      %s34 = sphi 0, %s31
      %s35 = sphi 0, %s32
      %s36 = sphi 0, %s33
      %s37 = sphi 0, %s34
      %s53 = sphi 0, %s55
      %s56 = sphi 0, %s53
      %s57 = sphi 0, %s56
      %s73 = sphi 0, %s57
      %s81 = sphi 0, %s83
      %s84 = sphi 0, %s81
      %s85 = sphi 0, %s84
      %s101 = sphi 0, %s85
      %s109 = sphi 0, %s111
      %s112 = sphi 0, %s109
      %s113 = sphi 0, %s112
      %s129 = sphi 0, %s113
      %s137 = sphi 0, %s139
      %s140 = sphi 0, %s137
      %s141 = sphi 0, %s140
      %s157 = sphi 0, %s141
    $region4: #{tpu_custom_call.1} parent=1 // loop_header_branch
      %25 = sbr.rel (%p23) target = $region8
    $region5: #{tpu_custom_call.1} parent=1 // loop_body
      %s27 = ssub.s32 %s22, 1
      %s28 = ssub.s32 %s22, 2
      %s38 = sadd.s32 1, %s31
      %p39 = scmp.ge.s32.totalorder %s38, 1
      %s40 = scalar_select %p39, 0, %s38
      %s41 = sadd.s32 1, %s30
      %s42 = scalar_select %p39, %s41, %s30
      %p43 = scmp.ge.s32.totalorder %s42, 1
      %s44 = scalar_select %p43, 0, %s42
      %s45 = sadd.s32 1, %s29
      %s46 = scalar_select %p43, %s45, %s29
      %p47 = scmp.ge.s32.totalorder %s46, 2
      %s48 = scalar_select %p47, 0, %s46
      %s49 = ssub.s32 %s29, %s48
      %s50 = ssub.s32 %s31, %s40
      %s51 = sor.u32 %s49, %s50
      %p52 = scmp.eq.s32.totalorder %s51, 0
      %s54 = sadd.s32 %s53, 1
      %s55 = scalar_select %p52, %s53, %s54
      %p58 = pneg %p52
      %p59 = scmp.eq.s32.totalorder %s22, 1
      %p60 = por %p58, %p59
      %p61 = scmp.ne.s32.totalorder %s53, %s56
      %p62 = scmp.eq.s32.totalorder %s22, 0
      %p63 = por %p61, %p62
      %p64 = scmp.ne.s32.totalorder %s53, %s56
      %p65 = scmp.eq.s32.totalorder %s27, 1
      %p66 = por %p64, %p65
      %p67 = scmp.ne.s32.totalorder %s56, %s57
      %p68 = scmp.eq.s32.totalorder %s27, 0
      %p69 = por %p67, %p68
      %p70 = scmp.ne.s32.totalorder %s56, %s57
      %p71 = scmp.eq.s32.totalorder %s28, 1
      %p72 = por %p70, %p71
      %p74 = scmp.ne.s32.totalorder %s57, %s73
      %p75 = scmp.eq.s32.totalorder %s28, 0
      %p76 = por %p74, %p75
      %s77 = ssub.s32 %s29, %s48
      %s78 = ssub.s32 %s31, %s40
      %s79 = sor.u32 %s77, %s78
      %p80 = scmp.eq.s32.totalorder %s79, 0
      %s82 = sadd.s32 %s81, 1
      %s83 = scalar_select %p80, %s81, %s82
      %p86 = pneg %p80
      %p87 = scmp.eq.s32.totalorder %s22, 1
      %p88 = por %p86, %p87
      %p89 = scmp.ne.s32.totalorder %s81, %s84
      %p90 = scmp.eq.s32.totalorder %s22, 0
      %p91 = por %p89, %p90
      %p92 = scmp.ne.s32.totalorder %s81, %s84
      %p93 = scmp.eq.s32.totalorder %s27, 1
      %p94 = por %p92, %p93
      %p95 = scmp.ne.s32.totalorder %s84, %s85
      %p96 = scmp.eq.s32.totalorder %s27, 0
      %p97 = por %p95, %p96
      %p98 = scmp.ne.s32.totalorder %s84, %s85
      %p99 = scmp.eq.s32.totalorder %s28, 1
      %p100 = por %p98, %p99
      %p102 = scmp.ne.s32.totalorder %s85, %s101
      %p103 = scmp.eq.s32.totalorder %s28, 0
      %p104 = por %p102, %p103
      %s105 = ssub.s32 %s29, %s48
      %s106 = ssub.s32 %s30, %s44
      %s107 = sor.u32 %s105, %s106
      %p108 = scmp.eq.s32.totalorder %s107, 0
      %s110 = sadd.s32 %s109, 1
      %s111 = scalar_select %p108, %s109, %s110
      %p114 = pneg %p108
      %p115 = scmp.eq.s32.totalorder %s22, 1
      %p116 = por %p114, %p115
      %p117 = scmp.ne.s32.totalorder %s109, %s112
      %p118 = scmp.eq.s32.totalorder %s22, 0
      %p119 = por %p117, %p118
      %p120 = scmp.ne.s32.totalorder %s109, %s112
      %p121 = scmp.eq.s32.totalorder %s27, 1
      %p122 = por %p120, %p121
      %p123 = scmp.ne.s32.totalorder %s112, %s113
      %p124 = scmp.eq.s32.totalorder %s27, 0
      %p125 = por %p123, %p124
      %p126 = scmp.ne.s32.totalorder %s112, %s113
      %p127 = scmp.eq.s32.totalorder %s28, 1
      %p128 = por %p126, %p127
      %p130 = scmp.ne.s32.totalorder %s113, %s129
      %p131 = scmp.eq.s32.totalorder %s28, 0
      %p132 = por %p130, %p131
      %s133 = ssub.s32 %s29, %s48
      %s134 = ssub.s32 %s30, %s44
      %s135 = sor.u32 %s133, %s134
      %p136 = scmp.eq.s32.totalorder %s135, 0
      %s138 = sadd.s32 %s137, 1
      %s139 = scalar_select %p136, %s137, %s138
      %p142 = pneg %p136
      %p143 = scmp.eq.s32.totalorder %s22, 1
      %p144 = por %p142, %p143
      %p145 = scmp.ne.s32.totalorder %s137, %s140
      %p146 = scmp.eq.s32.totalorder %s22, 0
      %p147 = por %p145, %p146
      %p148 = scmp.ne.s32.totalorder %s137, %s140
      %p149 = scmp.eq.s32.totalorder %s27, 1
      %p150 = por %p148, %p149
      %p151 = scmp.ne.s32.totalorder %s140, %s141
      %p152 = scmp.eq.s32.totalorder %s27, 0
      %p153 = por %p151, %p152
      %p154 = scmp.ne.s32.totalorder %s140, %s141
      %p155 = scmp.eq.s32.totalorder %s28, 1
      %p156 = por %p154, %p155
      %p158 = scmp.ne.s32.totalorder %s141, %s157
      %p159 = scmp.eq.s32.totalorder %s28, 0
      %p160 = por %p158, %p159
      %p161 = scmp.le.s32.totalorder 1, %s22
      %p162 = scmp.lt.s32.totalorder %s22, 3
      %p163 = pnand %p161, %p162
      %p164 = pneg %p163
      // Predicated region
      $region9: #{tpu_custom_call.1} parent=5 // pred_check
        _
      $region10: #{tpu_custom_call.1} parent=5 // pred_check_branch
        %166 = sbr.rel (%p163) target = $region12
      $region11: #{tpu_custom_call.1} parent=5 // pred_region
        %s167 = ssub.s32 %s22, 1
      $region12: #{tpu_custom_call.1} parent=5 // pred_fallthru
        _
      %p168 = scmp.lt.s32.totalorder %s22, 2
      // Predicated region
      $region13: #{tpu_custom_call.1} parent=5 // pred_check
        %p169 = pneg %p168
      $region14: #{tpu_custom_call.1} parent=5 // pred_check_branch
        %171 = sbr.rel (%p169) target = $region16
      $region15: #{tpu_custom_call.1} parent=5 // pred_region
        // Predicated region
        $region17: #{tpu_custom_call.1} parent=15 // pred_check
          %p172 = pneg %p63
        $region18: #{tpu_custom_call.1} parent=15 // pred_check_branch
          %174 = sbr.rel (%p172) target = $region20
        $region19: #{tpu_custom_call.1} parent=15 // pred_region
          %s175 = sand.u32 %s53, 1
          %s176 = scalar_lea.sflag [#allocation3], %s175
          %s177 = sand.u32 %s53, 1
          %s178 = smul.addr %s177, 32
          %s179 = scalar_lea.vmem [#allocation2], %s178
          %s181 = ssub.s32 512, 512
          %182 = vsyncadd %s176, %s181
          %s183 = smul.addr %s29, 4
          %s184 = sadd.s32 %s31, %s183
          %s185 = smul.addr %s184, 128
          %s186 = scalar_lea.hbm %s0, %s185
          %s187 = sshll.u32 %s179, 4
          %s188 = int_to_ptr.vmem [resolvable:$true] %s187
          %193 = dma.hbm_to_vmem [thread:$0]  %s186, 512, %s188, %s176, 128, 128, 8
        $region20: #{tpu_custom_call.1} parent=15 // pred_fallthru
          _
        // Predicated region
        $region21: #{tpu_custom_call.1} parent=15 // pred_check
          %p194 = pneg %p91
        $region22: #{tpu_custom_call.1} parent=15 // pred_check_branch
          %196 = sbr.rel (%p194) target = $region24
        $region23: #{tpu_custom_call.1} parent=15 // pred_region
          %s197 = sand.u32 %s81, 1
          %s198 = scalar_lea.sflag [#allocation6], %s197
          %s199 = sand.u32 %s81, 1
          %s200 = smul.addr %s199, 2
          %s201 = scalar_lea.vmem [#allocation5], %s200
          %s203 = ssub.s32 32, 32
          %204 = vsyncadd %s198, %s203
          %s205 = sadd.s32 %s31, %s29
          %s206 = smul.addr %s205, 32
          %s207 = scalar_lea.hbm %s1, %s206
          %s209 = sshll.u32 %s201, 4
          %s210 = int_to_ptr.vmem [resolvable:$true] %s209
          %212 = dma.hbm_to_vmem [thread:$0]  %s207, 32, %s210, %s198
        $region24: #{tpu_custom_call.1} parent=15 // pred_fallthru
          _
      $region16: #{tpu_custom_call.1} parent=5 // pred_fallthru
        _
      %p213 = scmp.le.s32.totalorder 1, %s22
      %p214 = scmp.lt.s32.totalorder %s22, 3
      %p215 = pnand %p213, %p214
      %p216 = pneg %p215
      // Predicated region
      $region25: #{tpu_custom_call.1} parent=5 // pred_check
        _
      $region26: #{tpu_custom_call.1} parent=5 // pred_check_branch
        %218 = sbr.rel (%p215) target = $region28
      $region27: #{tpu_custom_call.1} parent=5 // pred_region
        %s219 = ssub.s32 %s22, 1
        %s220 = sand.u32 %s56, 1
        %s221 = scalar_lea.sflag [#allocation3], %s220
        %s222 = sand.u32 %s56, 1
        %s223 = smul.addr %s222, 32
        %s224 = scalar_lea.vmem [#allocation2], %s223
        // Predicated region
        $region29: #{tpu_custom_call.1} parent=27 // pred_check
          %p225 = pneg %p69
        $region30: #{tpu_custom_call.1} parent=27 // pred_check_branch
          %227 = sbr.rel (%p225) target = $region32
        $region31: #{tpu_custom_call.1} parent=27 // pred_region
          %228 = dma.done %s221, 512
        $region32: #{tpu_custom_call.1} parent=27 // pred_fallthru
          _
        %s229 = sand.u32 %s84, 1
        %s230 = scalar_lea.sflag [#allocation6], %s229
        %s231 = sand.u32 %s84, 1
        %s232 = smul.addr %s231, 2
        %s233 = scalar_lea.vmem [#allocation5], %s232
        // Predicated region
        $region33: #{tpu_custom_call.1} parent=27 // pred_check
          %p234 = pneg %p97
        $region34: #{tpu_custom_call.1} parent=27 // pred_check_branch
          %236 = sbr.rel (%p234) target = $region36
        $region35: #{tpu_custom_call.1} parent=27 // pred_region
          %237 = dma.done %s230, 32
        $region36: #{tpu_custom_call.1} parent=27 // pred_fallthru
          _
        %s238 = sand.u32 %s56, 1
        %s239 = scalar_lea.sflag [#allocation3], %s238
        %s240 = sand.u32 %s56, 1
        %s241 = smul.addr %s240, 32
        %s242 = scalar_lea.vmem [#allocation2], %s241
        %p243 = pneg %p69
        %p244 = pneg %p66
        %s245 = sand.u32 %s84, 1
        %s246 = scalar_lea.sflag [#allocation6], %s245
        %s247 = sand.u32 %s84, 1
        %s248 = smul.addr %s247, 2
        %s249 = scalar_lea.vmem [#allocation5], %s248
        %p250 = pneg %p97
        %p251 = pneg %p94
        %p252 = pneg %p125
        %p253 = pneg %p122
        %s254 = sand.u32 %s112, 1
        %s255 = scalar_lea.sflag [#allocation4], %s254
        %s256 = sand.u32 %s112, 1
        %s257 = scalar_lea.vmem [#allocation7], %s256
        %p258 = pneg %p153
        %p259 = pneg %p150
        %s260 = sand.u32 %s140, 1
        %s261 = scalar_lea.sflag [#allocation9], %s260
        %s262 = sand.u32 %s140, 1
        %s263 = scalar_lea.vmem [#allocation8], %s262
        %p264 = scmp.eq.s32.totalorder %s34, 0
        // Predicated region
        $region37: #{tpu_custom_call.1} parent=27 // pred_check
          %p265 = pneg %p264
        $region38: #{tpu_custom_call.1} parent=27 // pred_check_branch
          %267 = sbr.rel (%p265) target = $region40
        $region39: #{tpu_custom_call.1} parent=27 // pred_region
          %vm268 = vcmask 24576
          %269 = vst.msk [vmem:[%s257] sm:$0x1] %vm268, 0.0
          %270 = vst.msk [vmem:[%s263] sm:$0x1] %vm268, 0.0
        $region40: #{tpu_custom_call.1} parent=27 // pred_fallthru
          _
        %v271 = vld [vmem:[%s233] sm:$0x3]
        %v272 = vunpack.c.0.s8 %v271
        %v273 = vld [vmem:[%s224] sm:$0xff]
        %s274 = scalar_lea.vmem %s224, 8 [#allocation2]
        %v275 = vld [vmem:[%s274] sm:$0xff]
        %s276 = scalar_lea.vmem %s224, 16 [#allocation2]
        %v277 = vld [vmem:[%s276] sm:$0xff]
        %s278 = scalar_lea.vmem %s224, 24 [#allocation2]
        %v279 = vld [vmem:[%s278] sm:$0xff]
        %v280 = vmax.f32 %v273, %v275
        %v281 = vmax.f32 %v280, %v277
        %v282 = vmax.f32 %v281, %v279
        %v283 = vsub.f32 %v273, %v282
        %v284 = vmul.f32 %v283, 1.442695
        %v285 = vpow.pop %v284
        %v286 = vsub.f32 %v275, %v282
        %v287 = vmul.f32 %v286, 1.442695
        %v288 = vpow.pop %v287
        %v289 = vsub.f32 %v277, %v282
        %v290 = vmul.f32 %v289, 1.442695
        %v291 = vpow.pop %v290
        %v292 = vsub.f32 %v279, %v282
        %v293 = vmul.f32 %v292, 1.442695
        %v294 = vpow.pop %v293
        %v295 = vadd.f32 %v285, %v288
        %v296 = vadd.f32 %v295, %v291
        %v297 = vadd.f32 %v296, %v294
        %v298 = vrcp.pop %v297
        %v299 = vmul.f32 1.0, %v298
        %v300 = vlaneseq
        %v301 = vand.u32 %v300, 127
        %v302 = vmul.f32 %v285, %v299
        %vm303 = vcmp.eq.s32.totalorder %v272, 0
        %v304 = vsel %vm303, 1, 0
        %v305 = vcvt.s32.f32 %v304
        %v306 = vmul.f32 %v302, %v305
        %vm307 = vcmask 261120
        %v308 = vsel %vm307, %v306, 0.0
        %309 = vadd.xlane.f32.xlu0 %v308
        %v310 = vpop.xlane.xlu0 %309
        %v311 = vrot.slane %v310, 4
        %v312 = vadd.f32 %v310, %v311
        %v313 = vrot.slane %v312, 2
        %v314 = vadd.f32 %v312, %v313
        %v315 = vrot.slane %v314, 1
        %v316 = vadd.f32 %v314, %v315
        %v317 = vmul.f32 %v302, %v302
        %v318 = vadd.f32 %v317, %v305
        %v319 = vsel %vm307, %v318, 0.0
        %320 = vadd.xlane.f32.xlu0 %v319
        %v321 = vpop.xlane.xlu0 %320
        %v322 = vrot.slane %v321, 4
        %v323 = vadd.f32 %v321, %v322
        %v324 = vrot.slane %v323, 2
        %v325 = vadd.f32 %v323, %v324
        %v326 = vrot.slane %v325, 1
        %v327 = vadd.f32 %v325, %v326
        %vm328 = vcmp.eq.s32.totalorder %v301, 0
        %v329 = vsel %vm328, %v316, 0.0
        %v330 = vsel %vm328, %v327, 0.0
        %v331 = vmul.f32 %v288, %v299
        %vm332 = vcmp.eq.s32.totalorder %v272, 1
        %v333 = vsel %vm332, 1, 0
        %v334 = vcvt.s32.f32 %v333
        %v335 = vmul.f32 %v331, %v334
        %v336 = vsel %vm307, %v335, 0.0
        %337 = vadd.xlane.f32.xlu0 %v336
        %v338 = vpop.xlane.xlu0 %337
        %v339 = vrot.slane %v338, 4
        %v340 = vadd.f32 %v338, %v339
        %v341 = vrot.slane %v340, 2
        %v342 = vadd.f32 %v340, %v341
        %v343 = vrot.slane %v342, 1
        %v344 = vadd.f32 %v342, %v343
        %v345 = vmul.f32 %v331, %v331
        %v346 = vadd.f32 %v345, %v334
        %v347 = vsel %vm307, %v346, 0.0
        %348 = vadd.xlane.f32.xlu0 %v347
        %v349 = vpop.xlane.xlu0 %348
        %v350 = vrot.slane %v349, 4
        %v351 = vadd.f32 %v349, %v350
        %v352 = vrot.slane %v351, 2
        %v353 = vadd.f32 %v351, %v352
        %v354 = vrot.slane %v353, 1
        %v355 = vadd.f32 %v353, %v354
        %vm356 = vcmp.eq.s32.totalorder %v301, 1
        %v357 = vsel %vm356, %v344, %v329
        %v358 = vsel %vm356, %v355, %v330
        %v359 = vmul.f32 %v291, %v299
        %vm360 = vcmp.eq.s32.totalorder %v272, 2
        %v361 = vsel %vm360, 1, 0
        %v362 = vcvt.s32.f32 %v361
        %v363 = vmul.f32 %v359, %v362
        %v364 = vsel %vm307, %v363, 0.0
        %365 = vadd.xlane.f32.xlu0 %v364
        %v366 = vpop.xlane.xlu0 %365
        %v367 = vrot.slane %v366, 4
        %v368 = vadd.f32 %v366, %v367
        %v369 = vrot.slane %v368, 2
        %v370 = vadd.f32 %v368, %v369
        %v371 = vrot.slane %v370, 1
        %v372 = vadd.f32 %v370, %v371
        %v373 = vmul.f32 %v359, %v359
        %v374 = vadd.f32 %v373, %v362
        %v375 = vsel %vm307, %v374, 0.0
        %376 = vadd.xlane.f32.xlu0 %v375
        %v377 = vpop.xlane.xlu0 %376
        %v378 = vrot.slane %v377, 4
        %v379 = vadd.f32 %v377, %v378
        %v380 = vrot.slane %v379, 2
        %v381 = vadd.f32 %v379, %v380
        %v382 = vrot.slane %v381, 1
        %v383 = vadd.f32 %v381, %v382
        %vm384 = vcmp.eq.s32.totalorder %v301, 2
        %v385 = vsel %vm384, %v372, %v357
        %v386 = vsel %vm384, %v383, %v358
        %v387 = vmul.f32 %v294, %v299
        %vm388 = vcmp.eq.s32.totalorder %v272, 3
        %v389 = vsel %vm388, 1, 0
        %v390 = vcvt.s32.f32 %v389
        %v391 = vmul.f32 %v387, %v390
        %v392 = vsel %vm307, %v391, 0.0
        %393 = vadd.xlane.f32.xlu0 %v392
        %v394 = vpop.xlane.xlu0 %393
        %v395 = vrot.slane %v394, 4
        %v396 = vadd.f32 %v394, %v395
        %v397 = vrot.slane %v396, 2
        %v398 = vadd.f32 %v396, %v397
        %v399 = vrot.slane %v398, 1
        %v400 = vadd.f32 %v398, %v399
        %v401 = vmul.f32 %v387, %v387
        %v402 = vadd.f32 %v401, %v390
        %v403 = vsel %vm307, %v402, 0.0
        %404 = vadd.xlane.f32.xlu0 %v403
        %v405 = vpop.xlane.xlu0 %404
        %v406 = vrot.slane %v405, 4
        %v407 = vadd.f32 %v405, %v406
        %v408 = vrot.slane %v407, 2
        %v409 = vadd.f32 %v407, %v408
        %v410 = vrot.slane %v409, 1
        %v411 = vadd.f32 %v409, %v410
        %vm412 = vcmp.eq.s32.totalorder %v301, 3
        %v413 = vsel %vm412, %v400, %v385
        %v414 = vsel %vm412, %v411, %v386
        %v415 = vld [vmem:[%s257] sm:$0x1]
        %v416 = vadd.f32 %v415, %v413
        %vm417 = vcmask 24576
        %418 = vst.msk [vmem:[%s257] sm:$0x1] %vm417, %v416
        %v419 = vld [vmem:[%s263] sm:$0x1]
        %v420 = vadd.f32 %v419, %v414
        %421 = vst.msk [vmem:[%s263] sm:$0x1] %vm417, %v420
        %s422 = sand.u32 %s112, 1
        %s423 = scalar_lea.sflag [#allocation4], %s422
        %s424 = sand.u32 %s112, 1
        %s425 = scalar_lea.vmem [#allocation7], %s424
        %s426 = sand.u32 %s140, 1
        %s427 = scalar_lea.sflag [#allocation9], %s426
        %s428 = sand.u32 %s140, 1
        %s429 = scalar_lea.vmem [#allocation8], %s428
        // Predicated region
        $region41: #{tpu_custom_call.1} parent=27 // pred_check
          %p430 = pneg %p122
        $region42: #{tpu_custom_call.1} parent=27 // pred_check_branch
          %432 = sbr.rel (%p430) target = $region44
        $region43: #{tpu_custom_call.1} parent=27 // pred_region
          %s434 = ssub.s32 16, 16
          %435 = vsyncadd %s423, %s434
          %s436 = sadd.s32 %s33, %s32
          %s437 = smul.addr %s436, 16
          %s438 = scalar_lea.hbm %s2, %s437
          %s440 = sshll.u32 %s425, 4
          %s441 = int_to_ptr.vmem [resolvable:$true] %s440
          %443 = dma.vmem_to_hbm [thread:$0]  %s441, 16, %s438, %s423
        $region44: #{tpu_custom_call.1} parent=27 // pred_fallthru
          _
        // Predicated region
        $region45: #{tpu_custom_call.1} parent=27 // pred_check
          %p444 = pneg %p150
        $region46: #{tpu_custom_call.1} parent=27 // pred_check_branch
          %446 = sbr.rel (%p444) target = $region48
        $region47: #{tpu_custom_call.1} parent=27 // pred_region
          %s448 = ssub.s32 16, 16
          %449 = vsyncadd %s427, %s448
          %s450 = sadd.s32 %s33, %s32
          %s451 = smul.addr %s450, 16
          %s452 = scalar_lea.hbm %s3, %s451
          %s454 = sshll.u32 %s429, 4
          %s455 = int_to_ptr.vmem [resolvable:$true] %s454
          %457 = dma.vmem_to_hbm [thread:$0]  %s455, 16, %s452, %s427
        $region48: #{tpu_custom_call.1} parent=27 // pred_fallthru
          _
      $region28: #{tpu_custom_call.1} parent=5 // pred_fallthru
        _
      %p458 = scmp.le.s32.totalorder 2, %s22
      // Predicated region
      $region49: #{tpu_custom_call.1} parent=5 // pred_check
        %p459 = pneg %p458
      $region50: #{tpu_custom_call.1} parent=5 // pred_check_branch
        %461 = sbr.rel (%p459) target = $region52
      $region51: #{tpu_custom_call.1} parent=5 // pred_region
        %s462 = ssub.s32 %s22, 2
        // Predicated region
        $region53: #{tpu_custom_call.1} parent=51 // pred_check
          %p463 = pneg %p128
        $region54: #{tpu_custom_call.1} parent=51 // pred_check_branch
          %465 = sbr.rel (%p463) target = $region56
        $region55: #{tpu_custom_call.1} parent=51 // pred_region
          %s466 = sand.u32 %s113, 1
          %s467 = scalar_lea.sflag [#allocation4], %s466
          %s468 = sand.u32 %s113, 1
          %s469 = scalar_lea.vmem [#allocation7], %s468
          %470 = dma.done %s467, 16
        $region56: #{tpu_custom_call.1} parent=51 // pred_fallthru
          _
        // Predicated region
        $region57: #{tpu_custom_call.1} parent=51 // pred_check
          %p471 = pneg %p156
        $region58: #{tpu_custom_call.1} parent=51 // pred_check_branch
          %473 = sbr.rel (%p471) target = $region60
        $region59: #{tpu_custom_call.1} parent=51 // pred_region
          %s474 = sand.u32 %s141, 1
          %s475 = scalar_lea.sflag [#allocation9], %s474
          %s476 = sand.u32 %s141, 1
          %s477 = scalar_lea.vmem [#allocation8], %s476
          %478 = dma.done %s475, 16
        $region60: #{tpu_custom_call.1} parent=51 // pred_fallthru
          _
      $region52: #{tpu_custom_call.1} parent=5 // pred_fallthru
        _
    $region6: #{tpu_custom_call.1} parent=1 // loop_footer
      %s26 = sadd.s32 1, %s22
    $region7: #{tpu_custom_call.1} parent=1 // loop_footer_branch
      %21 = sbr.rel target = $region3
    $region8: #{tpu_custom_call.1} parent=1 // loop_exit
      _
    %479 = vsyncpa [#allocation3], 1
    %s480 = scalar_lea.sflag [#allocation3], 1
    %481 = vsyncpa %s480, 1
    %482 = vsyncpa [#allocation6], 1
    %s483 = scalar_lea.sflag [#allocation6], 1
    %484 = vsyncpa %s483, 1
    %485 = vsyncpa [#allocation4], 1
    %s486 = scalar_lea.sflag [#allocation4], 1
    %487 = vsyncpa %s486, 1
    %488 = vsyncpa [#allocation9], 1
    %s489 = scalar_lea.sflag [#allocation9], 1
    %490 = vsyncpa %s489, 1

</llo_original>
